<compile_context>
chip_gen: v7x
topology: tpu7x:2x2x1
jax: 0.10.0
libtpu: 0.0.40
codegen_flags: <defaults>
</compile_context>

<pallas_src>
import functools

import jax
import jax.numpy as jnp
from jax.experimental import pallas as pl
from jax.experimental.pallas import tpu as pltpu

LANE = 128      # TPU lane width: hidden/logit dims padded to this
ODIM_PAD = 8    # width of the output HBM slab (>= output_dim)
HIDDEN = 32


def actor_kernel(x_ref, w1_ref, w23_ref, b_ref, o_ref, *, out_dim):
    # x_ref:   (TB, din)      f32   -- streamed per batch tile (cast to bf16 here)
    # w1_ref:  (din, 128)     bf16  -- VMEM-resident (constant index_map)
    # w23_ref: (2, 128, 128)  bf16  -- VMEM-resident (w2, w3 padded)
    # b_ref:   (3, 128)       f32   -- VMEM-resident; row 2 padded with -1e30
    # o_ref:   (TB, 8)        f32   -- narrow output slab (cols >= out_dim junk)
    b = b_ref[...]
    x = x_ref[...].astype(jnp.bfloat16)

    h1 = jnp.maximum(
        jnp.dot(x, w1_ref[...], preferred_element_type=jnp.float32)
        + b[0:1, :], 0.0)
    h2 = jnp.maximum(
        jnp.dot(h1.astype(jnp.bfloat16), w23_ref[0],
                preferred_element_type=jnp.float32) + b[1:2, :], 0.0)
    logits = jnp.dot(h2.astype(jnp.bfloat16), w23_ref[1],
                     preferred_element_type=jnp.float32) + b[2:3, :]

    # Softmax over the first `out_dim` lanes WITHOUT 128-lane XLU reductions:
    # every valid lane gathers its +-(out_dim-1) neighbours via pltpu.roll
    # (XLU slot, cheap) and combines them with elementwise max/add (VPU).
    # Padded lanes hold exactly -1e30 (zero weight columns + -1e30 bias), so
    # they lose every max and contribute 0 to every sum.
    shifts = []
    for s in range(1, out_dim):          # static unroll (out_dim = 2 -> 2 rolls)
        shifts.append(s)
        shifts.append(LANE - s)          # == roll by -s (avoid negative shifts)

    m = logits
    for s in shifts:
        m = jnp.maximum(m, pltpu.roll(logits, shift=s, axis=1))
    e = jnp.exp(logits - m)
    denom = e
    for s in shifts:
        denom = denom + pltpu.roll(e, shift=s, axis=1)

    probs = e * pl.reciprocal(denom, approx=True)
    o_ref[...] = probs[:, :ODIM_PAD]


@functools.partial(jax.jit, static_argnames=("output_dim", "block_batch"))
def actor_forward(x, packed, *, output_dim, block_batch=4096):
    """x: [batch, input_dim] f32 -> [batch, output_dim] f32 action probabilities."""
    w1p, w23, bp = packed
    batch, din = x.shape
    assert output_dim <= ODIM_PAD
    assert block_batch % 8 == 0
    # Batch tile: either the whole (possibly ragged) batch as one full-dim
    # block, or a multiple-of-8 tile with a masked partial last block.
    tb = min(block_batch, batch)
    grid = pl.cdiv(batch, tb)

    kernel = functools.partial(actor_kernel, out_dim=output_dim)
    out = pl.pallas_call(
        kernel,
        out_shape=jax.ShapeDtypeStruct((batch, ODIM_PAD), jnp.float32),
        grid_spec=pltpu.PrefetchScalarGridSpec(
            num_scalar_prefetch=0,
            grid=(grid,),
            in_specs=[
                pl.BlockSpec((tb, din), lambda i: (i, 0)),            # x: streams
                pl.BlockSpec((din, LANE), lambda i: (0, 0)),          # w1: resident
                pl.BlockSpec((2, LANE, LANE), lambda i: (0, 0, 0)),   # w2/w3: resident
                pl.BlockSpec((3, LANE), lambda i: (0, 0)),            # biases: resident
            ],
            out_specs=pl.BlockSpec((tb, ODIM_PAD), lambda i: (i, 0)),
        ),
        compiler_params=pltpu.CompilerParams(
            dimension_semantics=("parallel",),   # shard batch tiles across TCs
        ),
    )(x, w1p, w23, bp)
    return out[:, :output_dim]


def init_params(key, input_dim, output_dim, hidden=HIDDEN):
    """PyTorch nn.Linear-style init (U[-1/sqrt(fan_in), 1/sqrt(fan_in)]).

    Weights stored [in, out] (transposed vs. PyTorch's [out, in]); biases 1-D.
    """
    def linear(k, fan_in, fan_out):
        kw, kb = jax.random.split(k)
        bound = 1.0 / jnp.sqrt(float(fan_in))
        w = jax.random.uniform(kw, (fan_in, fan_out), jnp.float32, -bound, bound)
        b = jax.random.uniform(kb, (fan_out,), jnp.float32, -bound, bound)
        return w, b

    k1, k2, k3 = jax.random.split(key, 3)
    w1, b1 = linear(k1, input_dim, hidden)
    w2, b2 = linear(k2, hidden, hidden)
    w3, b3 = linear(k3, hidden, output_dim)
    return (w1, b1, w2, b2, w3, b3)


def pack_params(params):
    """Pack the 6 tiny param tensors into 3 padded, kernel-ready slabs."""
    w1, b1, w2, b2, w3, b3 = params
    din, hidden = w1.shape
    dout = w3.shape[1]
    assert hidden <= LANE and dout <= min(LANE, ODIM_PAD)

    w1p = jnp.zeros((din, LANE), jnp.float32).at[:, :hidden].set(w1)
    w23 = (jnp.zeros((2, LANE, LANE), jnp.float32)
           .at[0, :hidden, :hidden].set(w2)
           .at[1, :hidden, :dout].set(w3))
    bp = (jnp.zeros((3, LANE), jnp.float32)
          .at[0, :hidden].set(b1)
          .at[1, :hidden].set(b2)
          .at[2, :].set(-1e30)          # kill padded logit lanes in softmax
          .at[2, :dout].set(b3))
    return (w1p.astype(jnp.bfloat16), w23.astype(jnp.bfloat16), bp)


if __name__ == "__main__":
    input_dim, output_dim = 4, 2   # CartPole: 4 observations -> 2 actions

    key = jax.random.PRNGKey(0)
    k_params, k_a, k_b, k_c = jax.random.split(key, 4)
    params = init_params(k_params, input_dim, output_dim)
    packed = pack_params(params)

    def reference(x, params):
        w1, b1, w2, b2, w3, b3 = params
        h1 = jnp.maximum(x @ w1 + b1, 0.0)
        h2 = jnp.maximum(h1 @ w2 + b2, 0.0)
        return jax.nn.softmax(h2 @ w3 + b3, axis=-1)

    def check(x, **kw):
        out = jax.block_until_ready(
            actor_forward(x, packed, output_dim=output_dim, **kw))
        ref = reference(x, params)
        assert out.shape == (x.shape[0], output_dim)
        assert jnp.allclose(out, ref, atol=2.5e-2, rtol=2.5e-2)
        assert jnp.allclose(jnp.sum(out, axis=-1), 1.0, atol=1e-2)

    # Small batch: single full-dim block, no padding anywhere.
    check(jax.random.normal(k_a, (8, input_dim), jnp.float32))
    # Ragged single-tile batch (block rows == full array dim, not multiple of 8).
    check(jax.random.normal(k_b, (50, input_dim), jnp.float32))
    # Multi-tile batch exercising the grid and a masked partial last block.
    check(jax.random.normal(k_c, (200, input_dim), jnp.float32), block_batch=64)

    print("KERNEL_OK")
</pallas_src>

<mosaic_0001>
module attributes {stable_mosaic.version = 11 : i64} {
  func.func @actor_kernel(%arg0: i32, %arg1: memref<8x4xf32, #tpu.memory_space<vmem>>, %arg2: memref<4x128xbf16, #tpu.memory_space<vmem>>, %arg3: memref<2x128x128xbf16, #tpu.memory_space<vmem>>, %arg4: memref<3x128xf32, #tpu.memory_space<vmem>>, %arg5: memref<8x8xf32, #tpu.memory_space<vmem>>) attributes {dimension_semantics = [#tpu.dimension_semantics<parallel>], iteration_bounds = array<i64: 1>, scalar_prefetch = 0 : i64, scratch_operands = 0 : i64, tpu.core_type = #tpu.core_type<tc>, window_params = [{transform_indices = @transform_0, window_bounds = array<i64: 8, 4>}, {pipeline_mode = #tpu.pipeline_mode<synchronous>, transform_indices = @transform_1, window_bounds = array<i64: 4, 128>}, {pipeline_mode = #tpu.pipeline_mode<synchronous>, transform_indices = @transform_2, window_bounds = array<i64: 2, 128, 128>}, {pipeline_mode = #tpu.pipeline_mode<synchronous>, transform_indices = @transform_3, window_bounds = array<i64: 3, 128>}, {transform_indices = @transform_4, window_bounds = array<i64: 8, 8>}]} {
    %c0 = arith.constant 0 : index
    %c0_0 = arith.constant 0 : index
    %0 = vector.load %arg4[%c0, %c0_0] : memref<3x128xf32, #tpu.memory_space<vmem>>, vector<3x128xf32>
    %c0_1 = arith.constant 0 : index
    %c0_2 = arith.constant 0 : index
    %1 = vector.load %arg1[%c0_1, %c0_2] : memref<8x4xf32, #tpu.memory_space<vmem>>, vector<8x4xf32>
    %2 = arith.truncf %1 : vector<8x4xf32> to vector<8x4xbf16>
    %c0_3 = arith.constant 0 : index
    %c0_4 = arith.constant 0 : index
    %3 = vector.load %arg2[%c0_3, %c0_4] : memref<4x128xbf16, #tpu.memory_space<vmem>>, vector<4x128xbf16>
    %cst = arith.constant dense<0.000000e+00> : vector<8x128xf32>
    %4 = tpu.matmul %2, %3, %cst {dimension_numbers = #tpu.dot_dimension_numbers<[1], [0], [0], [1], [0, 0, 1, 1], [], []>} : vector<8x4xbf16>, vector<4x128xbf16>, vector<8x128xf32> -> vector<8x128xf32>
    %5 = vector.extract_strided_slice %0 {offsets = [0, 0], sizes = [1, 128], strides = [1, 1]} : vector<3x128xf32> to vector<1x128xf32>
    %6 = vector.broadcast %5 : vector<1x128xf32> to vector<8x128xf32>
    %7 = arith.addf %4, %6 : vector<8x128xf32>
    %cst_5 = arith.constant 0.000000e+00 : f32
    %8 = vector.broadcast %cst_5 : f32 to vector<8x128xf32>
    %9 = arith.maximumf %7, %8 : vector<8x128xf32>
    %10 = arith.truncf %9 : vector<8x128xf32> to vector<8x128xbf16>
    %c0_6 = arith.constant 0 : index
    %c0_7 = arith.constant 0 : index
    %c0_8 = arith.constant 0 : index
    %11 = vector.load %arg3[%c0_6, %c0_7, %c0_8] : memref<2x128x128xbf16, #tpu.memory_space<vmem>>, vector<1x128x128xbf16>
    %12 = vector.shape_cast %11 : vector<1x128x128xbf16> to vector<128x128xbf16>
    %cst_9 = arith.constant dense<0.000000e+00> : vector<8x128xf32>
    %13 = tpu.matmul %10, %12, %cst_9 {dimension_numbers = #tpu.dot_dimension_numbers<[1], [0], [0], [1], [0, 0, 1, 1], [], []>} : vector<8x128xbf16>, vector<128x128xbf16>, vector<8x128xf32> -> vector<8x128xf32>
    %14 = vector.extract_strided_slice %0 {offsets = [1, 0], sizes = [1, 128], strides = [1, 1]} : vector<3x128xf32> to vector<1x128xf32>
    %15 = vector.broadcast %14 : vector<1x128xf32> to vector<8x128xf32>
    %16 = arith.addf %13, %15 : vector<8x128xf32>
    %cst_10 = arith.constant 0.000000e+00 : f32
    %17 = vector.broadcast %cst_10 : f32 to vector<8x128xf32>
    %18 = arith.maximumf %16, %17 : vector<8x128xf32>
    %19 = arith.truncf %18 : vector<8x128xf32> to vector<8x128xbf16>
    %c1 = arith.constant 1 : index
    %c0_11 = arith.constant 0 : index
    %c0_12 = arith.constant 0 : index
    %20 = vector.load %arg3[%c1, %c0_11, %c0_12] : memref<2x128x128xbf16, #tpu.memory_space<vmem>>, vector<1x128x128xbf16>
    %21 = vector.shape_cast %20 : vector<1x128x128xbf16> to vector<128x128xbf16>
    %cst_13 = arith.constant dense<0.000000e+00> : vector<8x128xf32>
    %22 = tpu.matmul %19, %21, %cst_13 {dimension_numbers = #tpu.dot_dimension_numbers<[1], [0], [0], [1], [0, 0, 1, 1], [], []>} : vector<8x128xbf16>, vector<128x128xbf16>, vector<8x128xf32> -> vector<8x128xf32>
    %23 = vector.extract_strided_slice %0 {offsets = [2, 0], sizes = [1, 128], strides = [1, 1]} : vector<3x128xf32> to vector<1x128xf32>
    %24 = vector.broadcast %23 : vector<1x128xf32> to vector<8x128xf32>
    %25 = arith.addf %22, %24 : vector<8x128xf32>
    %c1_i32 = arith.constant 1 : i32
    %26 = tpu.dynamic_rotate %25 by %c1_i32 dim 1 : vector<8x128xf32>, i32 -> vector<8x128xf32>
    %27 = arith.maximumf %25, %26 : vector<8x128xf32>
    %c127_i32 = arith.constant 127 : i32
    %28 = tpu.dynamic_rotate %25 by %c127_i32 dim 1 : vector<8x128xf32>, i32 -> vector<8x128xf32>
    %29 = arith.maximumf %27, %28 : vector<8x128xf32>
    %30 = arith.subf %25, %29 : vector<8x128xf32>
    %31 = math.exp %30 : vector<8x128xf32>
    %c1_i32_14 = arith.constant 1 : i32
    %32 = tpu.dynamic_rotate %31 by %c1_i32_14 dim 1 : vector<8x128xf32>, i32 -> vector<8x128xf32>
    %33 = arith.addf %31, %32 : vector<8x128xf32>
    %c127_i32_15 = arith.constant 127 : i32
    %34 = tpu.dynamic_rotate %31 by %c127_i32_15 dim 1 : vector<8x128xf32>, i32 -> vector<8x128xf32>
    %35 = arith.addf %33, %34 : vector<8x128xf32>
    %36 = tpu.reciprocal %35 {approx = true} : vector<8x128xf32> -> vector<8x128xf32>
    %37 = arith.mulf %31, %36 : vector<8x128xf32>
    %38 = vector.extract_strided_slice %37 {offsets = [0, 0], sizes = [8, 8], strides = [1, 1]} : vector<8x128xf32> to vector<8x8xf32>
    %c0_16 = arith.constant 0 : index
    %c0_17 = arith.constant 0 : index
    %39 = vector.load %arg5[%c0_16, %c0_17] : memref<8x8xf32, #tpu.memory_space<vmem>>, vector<8x8xf32>
    tpu.vector_store %arg5[%c0_16, %c0_17], %38 {strides = array<i32>} : memref<8x8xf32, #tpu.memory_space<vmem>>, vector<8x8xf32>,
    return
  }
  func.func @transform_0(%arg0: i32) -> (i32, i32) {
    %c0_i32 = arith.constant 0 : i32
    %c0_i32_0 = arith.constant 0 : i32
    return %arg0, %c0_i32 : i32, i32
  }
  func.func @transform_1(%arg0: i32) -> (i32, i32) {
    %c0_i32 = arith.constant 0 : i32
    %c0_i32_0 = arith.constant 0 : i32
    %c0_i32_1 = arith.constant 0 : i32
    return %c0_i32, %c0_i32_0 : i32, i32
  }
  func.func @transform_2(%arg0: i32) -> (i32, i32, i32) {
    %c0_i32 = arith.constant 0 : i32
    %c0_i32_0 = arith.constant 0 : i32
    %c0_i32_1 = arith.constant 0 : i32
    %c0_i32_2 = arith.constant 0 : i32
    return %c0_i32, %c0_i32_0, %c0_i32_1 : i32, i32, i32
  }
  func.func @transform_3(%arg0: i32) -> (i32, i32) {
    %c0_i32 = arith.constant 0 : i32
    %c0_i32_0 = arith.constant 0 : i32
    %c0_i32_1 = arith.constant 0 : i32
    return %c0_i32, %c0_i32_0 : i32, i32
  }
  func.func @transform_4(%arg0: i32) -> (i32, i32) {
    %c0_i32 = arith.constant 0 : i32
    %c0_i32_0 = arith.constant 0 : i32
    return %arg0, %c0_i32 : i32, i32
  }
}

</mosaic_0001>

<llo_original>
// kernel: actor_forward.1
$region0: #{actor_forward.1}
  #allocation0 [shape = 'u32[]', space=smem, size = 0x4, offset = 0x4, fixed_abs, tag = 'smem constant byte address 0x4 - core index']
  #allocation1 [shape = 'u32[144,128]{1,0:T(1,128)}', space=vmem, size = 0x12000, scoped, tag = 'internal scratch']
  %s0 = inlined_call_operand.vmem [shape: f32[8,4], index: 0, kind: input, shape index: {}]
  %s1 = inlined_call_operand.vmem [shape: bf16[4,128], index: 1, kind: input, shape index: {}]
  %s2 = inlined_call_operand.hbm [shape: bf16[2,128,128], index: 2, kind: input, shape index: {}]
  %s3 = inlined_call_operand.vmem [shape: f32[3,128], index: 3, kind: input, shape index: {}]
  %s4 = inlined_call_operand.vmem [shape: f32[8,8], index: 4, kind: output, shape index: {}]
  %s5 = sld [smem:[#allocation0]]
  $region30: #{actor_forward.1} parent=0
    _
  %s7 = ssub.s32 1, %s5
  %s8 = scalar_select 0, %s7, %s5
  $region1: #{actor_forward.1} parent=0
    #allocation2 [shape = 'u8[65536]{0}', space=vmem, size = 0x10000, scoped, tag = 'input window, operand 2, single buffered']
    #allocation3 [shape = 's32[1]{0}', space=sflag, size = 0x4, scoped, tag = 'scoped memory for actor_forward.1']
    %9 = vsyncpa [#allocation3], 0
    // Predicated region
    $region2: #{actor_forward.1} parent=1 // pred_check
      _
    $region3: #{actor_forward.1} parent=1 // pred_check_branch
      %11 = sbr.rel (0) target = $region5
    $region4: #{actor_forward.1} parent=1 // pred_region
      _
    $region5: #{actor_forward.1} parent=1 // pred_fallthru
      _
    // Predicated region
    $region6: #{actor_forward.1} parent=1 // pred_check
      _
    $region7: #{actor_forward.1} parent=1 // pred_check_branch
      %13 = sbr.rel (0) target = $region9
    $region8: #{actor_forward.1} parent=1 // pred_region
      _
    $region9: #{actor_forward.1} parent=1 // pred_fallthru
      _
    // Predicated region
    $region10: #{actor_forward.1} parent=1 // pred_check
      _
    $region11: #{actor_forward.1} parent=1 // pred_check_branch
      %15 = sbr.rel (0) target = $region13
    $region12: #{actor_forward.1} parent=1 // pred_region
      %s17 = ssub.s32 2048, 2048
      %18 = vsyncadd [#allocation3], %s17
      %s19 = sshll.u32 [#allocation2], 4
      %s20 = int_to_ptr.vmem [resolvable:$true] %s19
      %25 = dma.hbm_to_vmem [thread:$0]  %s2, 2048, %s20, [#allocation3], 64, 64, 4
    $region13: #{actor_forward.1} parent=1 // pred_fallthru
      _
    // Predicated region
    $region14: #{actor_forward.1} parent=1 // pred_check
      _
    $region15: #{actor_forward.1} parent=1 // pred_check_branch
      %27 = sbr.rel (0) target = $region17
    $region16: #{actor_forward.1} parent=1 // pred_region
      _
    $region17: #{actor_forward.1} parent=1 // pred_fallthru
      _
    // Predicated region
    $region18: #{actor_forward.1} parent=1 // pred_check
      _
    $region19: #{actor_forward.1} parent=1 // pred_check_branch
      %29 = sbr.rel (0) target = $region21
    $region20: #{actor_forward.1} parent=1 // pred_region
      %30 = dma.done [#allocation3], 2048
    $region21: #{actor_forward.1} parent=1 // pred_fallthru
      _
    %v32 = vld [vmem:[%s3] sm:$0x7]
    %v33 = vld [vmem:[%s0] sm:$0xff]
    %v34 = vpack.c.bf16 %v33, %v33
    %v35 = vld [vmem:[%s1] sm:$0x3]
    %v36 = vlaneseq
    %v37 = vshrl.u32 %v36, 7
    %v38 = vsub.s32 0, %v37
    %v39 = vrot.slane %v32, %v38
    %vm40 = vcmask 31744
    %v42 = vsel %vm40, %v34, 0
    %vm44 = vcmask 1041408
    %v46 = vsel %vm44, %v35, 0
    %48 = vmatprep.subr.bf16.mxu0 0
    %49 = vmatpush1.bf16.msra.mxu0 %v46
    %50 = vmatprep.subr.bf16.mxu0 0
    %51 = vmatpush1.bf16.msra.mxu0 0
    %52 = vmatprep.subr.bf16.mxu0 0
    %53 = vmatpush1.bf16.msra.mxu0 0
    %54 = vmatprep.subr.bf16.mxu0 0
    %55 = vmatpush1.bf16.msra.mxu0 0
    %56 = vmatprep.subr.bf16.mxu0 0
    %57 = vmatpush1.bf16.msra.mxu0 0
    %58 = vmatprep.subr.bf16.mxu0 0
    %59 = vmatpush1.bf16.msra.mxu0 0
    %60 = vmatprep.subr.bf16.mxu0 0
    %61 = vmatpush1.bf16.msra.mxu0 0
    %62 = vmatprep.subr.bf16.mxu0 0
    %63 = vmatpush1.bf16.msra.mxu0 0
    %64 = vmatprep.subr.bf16.mxu0 0
    %65 = vmatpush1.bf16.msra.mxu0 0
    %66 = vmatprep.subr.bf16.mxu0 0
    %67 = vmatpush1.bf16.msra.mxu0 0
    %68 = vmatprep.subr.bf16.mxu0 0
    %69 = vmatpush1.bf16.msra.mxu0 0
    %70 = vmatprep.subr.bf16.mxu0 0
    %71 = vmatpush1.bf16.msra.mxu0 0
    %72 = vmatprep.subr.bf16.mxu0 0
    %73 = vmatpush1.bf16.msra.mxu0 0
    %74 = vmatprep.subr.bf16.mxu0 0
    %75 = vmatpush1.bf16.msra.mxu0 0
    %76 = vmatprep.subr.bf16.mxu0 0
    %77 = vmatpush1.bf16.msra.mxu0 0
    %78 = vmatprep.subr.bf16.mxu0 0
    %79 = vmatpush1.bf16.msra.mxu0 0
    %80 = vmatprep.mubr.bf16.mxu0 0
    %81 = vmatmul.mubr.bf16.gmra.mrb[0].mxu0 %v42
    %v82 = vpop.f32.mrb[0].mxu0
    %v83 = vadd.f32 %v39, %v82
    %v84 = vpop.f32.mrb[0].mxu0
    %v85 = vpop.f32.mrb[0].mxu0
    %v86 = vpop.f32.mrb[0].mxu0
    %87 = vdwg.mxu0
    %v88 = vmax.f32 %v83, 0.0
    %v89 = vpack.c.bf16 %v88, %v88
    %v90 = vld [vmem:[#allocation2] sm:$0xf]
    %v91 = vld [vmem:[#allocation2 + $0x4] sm:$0xf]
    %v92 = vld [vmem:[#allocation2 + $0x8] sm:$0xf]
    %v93 = vld [vmem:[#allocation2 + $0xc] sm:$0xf]
    %v94 = vld [vmem:[#allocation2 + $0x10] sm:$0xf]
    %v95 = vld [vmem:[#allocation2 + $0x14] sm:$0xf]
    %v96 = vld [vmem:[#allocation2 + $0x18] sm:$0xf]
    %v97 = vld [vmem:[#allocation2 + $0x1c] sm:$0xf]
    %v98 = vld [vmem:[#allocation2 + $0x20] sm:$0xf]
    %v99 = vld [vmem:[#allocation2 + $0x24] sm:$0xf]
    %v100 = vld [vmem:[#allocation2 + $0x28] sm:$0xf]
    %v101 = vld [vmem:[#allocation2 + $0x2c] sm:$0xf]
    %v102 = vld [vmem:[#allocation2 + $0x30] sm:$0xf]
    %v103 = vld [vmem:[#allocation2 + $0x34] sm:$0xf]
    %v104 = vld [vmem:[#allocation2 + $0x38] sm:$0xf]
    %v105 = vld [vmem:[#allocation2 + $0x3c] sm:$0xf]
    %v106 = vlaneseq
    %v107 = vshrl.u32 %v106, 7
    %v108 = vsub.s32 1, %v107
    %v109 = vrot.slane %v32, %v108
    %v126 = vunpack.c.l.b16 %v90
    %v127 = vunpack.c.l.b16 %v91
    %v128 = vunpack.c.l.b16 %v92
    %v129 = vunpack.c.l.b16 %v93
    %v130 = vunpack.c.l.b16 %v94
    %v131 = vunpack.c.l.b16 %v95
    %v132 = vunpack.c.l.b16 %v96
    %v133 = vunpack.c.l.b16 %v97
    %v134 = vunpack.c.l.b16 %v98
    %v135 = vunpack.c.l.b16 %v99
    %v136 = vunpack.c.l.b16 %v100
    %v137 = vunpack.c.l.b16 %v101
    %v138 = vunpack.c.l.b16 %v102
    %v139 = vunpack.c.l.b16 %v103
    %v140 = vunpack.c.l.b16 %v104
    %v141 = vunpack.c.l.b16 %v105
    %v142 = vpack.c.b16 %v127, %v126
    %v143 = vpack.c.b16 %v129, %v128
    %v144 = vpack.c.b16 %v131, %v130
    %v145 = vpack.c.b16 %v133, %v132
    %v146 = vpack.c.b16 %v135, %v134
    %v147 = vpack.c.b16 %v137, %v136
    %v148 = vpack.c.b16 %v139, %v138
    %v149 = vpack.c.b16 %v141, %v140
    %158 = vmatprep.subr.bf16.mxu0 0
    %159 = vmatpush1.bf16.msra.mxu0 %v142
    %160 = vmatprep.subr.bf16.mxu0 0
    %161 = vmatpush1.bf16.msra.mxu0 %v143
    %162 = vmatprep.subr.bf16.mxu0 0
    %163 = vmatpush1.bf16.msra.mxu0 %v144
    %164 = vmatprep.subr.bf16.mxu0 0
    %165 = vmatpush1.bf16.msra.mxu0 %v145
    %166 = vmatprep.subr.bf16.mxu0 0
    %167 = vmatpush1.bf16.msra.mxu0 %v146
    %168 = vmatprep.subr.bf16.mxu0 0
    %169 = vmatpush1.bf16.msra.mxu0 %v147
    %170 = vmatprep.subr.bf16.mxu0 0
    %171 = vmatpush1.bf16.msra.mxu0 %v148
    %172 = vmatprep.subr.bf16.mxu0 0
    %173 = vmatpush1.bf16.msra.mxu0 %v149
    %174 = vmatprep.subr.bf16.mxu0 0
    %175 = vmatpush1.bf16.msra.mxu0 0
    %176 = vmatprep.subr.bf16.mxu0 0
    %177 = vmatpush1.bf16.msra.mxu0 0
    %178 = vmatprep.subr.bf16.mxu0 0
    %179 = vmatpush1.bf16.msra.mxu0 0
    %180 = vmatprep.subr.bf16.mxu0 0
    %181 = vmatpush1.bf16.msra.mxu0 0
    %182 = vmatprep.subr.bf16.mxu0 0
    %183 = vmatpush1.bf16.msra.mxu0 0
    %184 = vmatprep.subr.bf16.mxu0 0
    %185 = vmatpush1.bf16.msra.mxu0 0
    %186 = vmatprep.subr.bf16.mxu0 0
    %187 = vmatpush1.bf16.msra.mxu0 0
    %188 = vmatprep.subr.bf16.mxu0 0
    %189 = vmatpush1.bf16.msra.mxu0 0
    %190 = vmatprep.mubr.bf16.mxu0 0
    %191 = vmatmul.mubr.bf16.gmra.mrb[0].mxu0 %v89
    %v192 = vpop.f32.mrb[0].mxu0
    %v193 = vadd.f32 %v109, %v192
    %v194 = vpop.f32.mrb[0].mxu0
    %v195 = vpop.f32.mrb[0].mxu0
    %v196 = vpop.f32.mrb[0].mxu0
    %197 = vdwg.mxu0
    %v198 = vmax.f32 %v193, 0.0
    %v199 = vpack.c.bf16 %v198, %v198
    %s200 = scalar_lea.vmem [#allocation2], 64
    %v201 = vld [vmem:[%s200] sm:$0xf]
    %v202 = vld [vmem:[%s200 + $0x4] sm:$0xf]
    %v203 = vld [vmem:[%s200 + $0x8] sm:$0xf]
    %v204 = vld [vmem:[%s200 + $0xc] sm:$0xf]
    %v205 = vld [vmem:[%s200 + $0x10] sm:$0xf]
    %v206 = vld [vmem:[%s200 + $0x14] sm:$0xf]
    %v207 = vld [vmem:[%s200 + $0x18] sm:$0xf]
    %v208 = vld [vmem:[%s200 + $0x1c] sm:$0xf]
    %v209 = vld [vmem:[%s200 + $0x20] sm:$0xf]
    %v210 = vld [vmem:[%s200 + $0x24] sm:$0xf]
    %v211 = vld [vmem:[%s200 + $0x28] sm:$0xf]
    %v212 = vld [vmem:[%s200 + $0x2c] sm:$0xf]
    %v213 = vld [vmem:[%s200 + $0x30] sm:$0xf]
    %v214 = vld [vmem:[%s200 + $0x34] sm:$0xf]
    %v215 = vld [vmem:[%s200 + $0x38] sm:$0xf]
    %v216 = vld [vmem:[%s200 + $0x3c] sm:$0xf]
    %v217 = vlaneseq
    %v218 = vshrl.u32 %v217, 7
    %v219 = vsub.s32 2, %v218
    %v220 = vrot.slane %v32, %v219
    %v237 = vunpack.c.l.b16 %v201
    %v238 = vunpack.c.l.b16 %v202
    %v239 = vunpack.c.l.b16 %v203
    %v240 = vunpack.c.l.b16 %v204
    %v241 = vunpack.c.l.b16 %v205
    %v242 = vunpack.c.l.b16 %v206
    %v243 = vunpack.c.l.b16 %v207
    %v244 = vunpack.c.l.b16 %v208
    %v245 = vunpack.c.l.b16 %v209
    %v246 = vunpack.c.l.b16 %v210
    %v247 = vunpack.c.l.b16 %v211
    %v248 = vunpack.c.l.b16 %v212
    %v249 = vunpack.c.l.b16 %v213
    %v250 = vunpack.c.l.b16 %v214
    %v251 = vunpack.c.l.b16 %v215
    %v252 = vunpack.c.l.b16 %v216
    %v253 = vpack.c.b16 %v238, %v237
    %v254 = vpack.c.b16 %v240, %v239
    %v255 = vpack.c.b16 %v242, %v241
    %v256 = vpack.c.b16 %v244, %v243
    %v257 = vpack.c.b16 %v246, %v245
    %v258 = vpack.c.b16 %v248, %v247
    %v259 = vpack.c.b16 %v250, %v249
    %v260 = vpack.c.b16 %v252, %v251
    %269 = vmatprep.subr.bf16.mxu0 0
    %270 = vmatpush1.bf16.msra.mxu0 %v253
    %271 = vmatprep.subr.bf16.mxu0 0
    %272 = vmatpush1.bf16.msra.mxu0 %v254
    %273 = vmatprep.subr.bf16.mxu0 0
    %274 = vmatpush1.bf16.msra.mxu0 %v255
    %275 = vmatprep.subr.bf16.mxu0 0
    %276 = vmatpush1.bf16.msra.mxu0 %v256
    %277 = vmatprep.subr.bf16.mxu0 0
    %278 = vmatpush1.bf16.msra.mxu0 %v257
    %279 = vmatprep.subr.bf16.mxu0 0
    %280 = vmatpush1.bf16.msra.mxu0 %v258
    %281 = vmatprep.subr.bf16.mxu0 0
    %282 = vmatpush1.bf16.msra.mxu0 %v259
    %283 = vmatprep.subr.bf16.mxu0 0
    %284 = vmatpush1.bf16.msra.mxu0 %v260
    %285 = vmatprep.subr.bf16.mxu0 0
    %286 = vmatpush1.bf16.msra.mxu0 0
    %287 = vmatprep.subr.bf16.mxu0 0
    %288 = vmatpush1.bf16.msra.mxu0 0
    %289 = vmatprep.subr.bf16.mxu0 0
    %290 = vmatpush1.bf16.msra.mxu0 0
    %291 = vmatprep.subr.bf16.mxu0 0
    %292 = vmatpush1.bf16.msra.mxu0 0
    %293 = vmatprep.subr.bf16.mxu0 0
    %294 = vmatpush1.bf16.msra.mxu0 0
    %295 = vmatprep.subr.bf16.mxu0 0
    %296 = vmatpush1.bf16.msra.mxu0 0
    %297 = vmatprep.subr.bf16.mxu0 0
    %298 = vmatpush1.bf16.msra.mxu0 0
    %299 = vmatprep.subr.bf16.mxu0 0
    %300 = vmatpush1.bf16.msra.mxu0 0
    %301 = vmatprep.mubr.bf16.mxu0 0
    %302 = vmatmul.mubr.bf16.gmra.mrb[0].mxu0 %v199
    %v303 = vpop.f32.mrb[0].mxu0
    %v304 = vadd.f32 %v220, %v303
    %v305 = vpop.f32.mrb[0].mxu0
    %v306 = vpop.f32.mrb[0].mxu0
    %v307 = vpop.f32.mrb[0].mxu0
    %308 = vdwg.mxu0
    %309 = vrot.lane.b32.xlu0 %v304, 1
    %v310 = vpop.permute.xlu0 %309
    %v311 = vmax.f32 %v304, %v310
    %312 = vrot.lane.b32.xlu0 %v304, 127
    %v313 = vpop.permute.xlu0 %312
    %v314 = vmax.f32 %v311, %v313
    %v315 = vsub.f32 %v304, %v314
    %v316 = vmul.f32 %v315, 1.442695
    %v317 = vpow.pop %v316
    %318 = vrot.lane.b32.xlu0 %v317, 1
    %v319 = vpop.permute.xlu0 %318
    %v320 = vadd.f32 %v317, %v319
    %321 = vrot.lane.b32.xlu0 %v317, 127
    %v322 = vpop.permute.xlu0 %321
    %v323 = vadd.f32 %v320, %v322
    %v324 = vrcp.pop %v323
    %v325 = vmul.f32 %v317, %v324
    %vm326 = vcmask 64512
    %327 = vst.msk [vmem:[%s4] sm:$0xff] %vm326, %v325
    // Predicated region
    $region22: #{actor_forward.1} parent=1 // pred_check
      _
    $region23: #{actor_forward.1} parent=1 // pred_check_branch
      %329 = sbr.rel (0) target = $region25
    $region24: #{actor_forward.1} parent=1 // pred_region
      _
    $region25: #{actor_forward.1} parent=1 // pred_fallthru
      _
    // Predicated region
    $region26: #{actor_forward.1} parent=1 // pred_check
      _
    $region27: #{actor_forward.1} parent=1 // pred_check_branch
      %331 = sbr.rel (0) target = $region29
    $region28: #{actor_forward.1} parent=1 // pred_region
      _
    $region29: #{actor_forward.1} parent=1 // pred_fallthru
      _
    %332 = vsyncpa [#allocation3], 1

</llo_original>
